<compile_context>
chip_gen: v7x
topology: tpu7x:2x2x1
jax: 0.10.0
libtpu: 0.0.40
codegen_flags: <defaults>
</compile_context>

<pallas_src>
import jax
import jax.numpy as jnp
from jax.experimental import pallas as pl
from jax.experimental.pallas import tpu as pltpu

HIDDEN = 64        # hidden width of lin1 / lin2
_LANE = 128        # lane width (batch rides this axis)
_SUBLANE = 8       # f32 sublane packing (output rows padded to this)
_BF16_PACK = 16    # bf16 sublane packing (input feature dim padded to this)


def _round_up(x, m):
    return (x + m - 1) // m * m


def _dnn_kernel(x_ref, w1_ref, b1_ref, w2_ref, b2_ref, w3_ref, b3_ref, o_ref):
    # Transposed layout: batch rides the lane axis.
    #   x_ref : (IN_PAD, TB)   bf16   -- one batch tile, lane-dense
    #   w*_ref: (out_f, in_f)  bf16   -- W^T, full-VMEM residents
    #   b*_ref: (out_f, 1)     f32    -- broadcast along lanes
    #   o_ref : (OUT_SUB, TB)  f32    -- narrow, lane-dense output slab
    x = x_ref[...]
    h1 = jnp.dot(w1_ref[...], x, preferred_element_type=jnp.float32) + b1_ref[...]
    h1 = jnp.maximum(h1, 0.0)
    h2 = jnp.dot(w2_ref[...], h1.astype(jnp.bfloat16),
                 preferred_element_type=jnp.float32) + b2_ref[...]
    h2 = jnp.maximum(h2, 0.0)
    out = jnp.dot(w3_ref[...], h2.astype(jnp.bfloat16),
                  preferred_element_type=jnp.float32) + b3_ref[...]
    o_ref[...] = out


def init_params(key, input_shape, output_shape):
    """PyTorch nn.Linear-style init (uniform +-1/sqrt(fan_in)); weights stored (in, out)."""
    ks = jax.random.split(key, 6)

    def lin(kw, kb, fan_in, fan_out):
        bound = 1.0 / jnp.sqrt(jnp.float32(fan_in))
        w = jax.random.uniform(kw, (fan_in, fan_out), jnp.float32, -bound, bound)
        b = jax.random.uniform(kb, (1, fan_out), jnp.float32, -bound, bound)
        return w, b

    w1, b1 = lin(ks[0], ks[1], input_shape, HIDDEN)
    w2, b2 = lin(ks[2], ks[3], HIDDEN, HIDDEN)
    w3, b3 = lin(ks[4], ks[5], HIDDEN, output_shape)
    return {"w1": w1, "b1": b1, "w2": w2, "b2": b2, "w3": w3, "b3": b3}


def prepare_params(params):
    """Transpose + pad + cast params for the batch-on-lanes kernel:
    weights stored as W^T in bf16 (w1 feature dim padded to a bf16-friendly 16,
    w3/b3 output dim zero-padded to 8 sublanes), biases as (out, 1) f32 columns."""
    w1, b1 = params["w1"], params["b1"]
    w2, b2 = params["w2"], params["b2"]
    w3, b3 = params["w3"], params["b3"]
    in_dim = w1.shape[0]
    out_dim = w3.shape[1]
    in_pad = _round_up(in_dim, _BF16_PACK)
    out_sub = _round_up(out_dim, _SUBLANE)

    w1t = jnp.zeros((HIDDEN, in_pad), jnp.float32).at[:, :in_dim].set(w1.T)
    w2t = w2.T
    w3t = jnp.zeros((out_sub, HIDDEN), jnp.float32).at[:out_dim, :].set(w3.T)
    b3t = jnp.zeros((out_sub, 1), jnp.float32).at[:out_dim, :].set(b3.reshape(-1, 1))

    return {
        "w1": w1t.astype(jnp.bfloat16), "b1": b1.reshape(-1, 1).astype(jnp.float32),
        "w2": w2t.astype(jnp.bfloat16), "b2": b2.reshape(-1, 1).astype(jnp.float32),
        "w3": w3t.astype(jnp.bfloat16), "b3": b3t,
        "in_dim": in_dim, "out_dim": out_dim,
    }


def _choose_tiling(batch, block_batch):
    """Batch rides the lane axis -> pad to a multiple of 128. Pick the biggest
    tile that fits the requested block_batch, make the padded batch a multiple
    of the tile, and prefer >= 2 grid steps when there is enough work so both
    v7x TensorCores get used (no-op on single-TC v5e/v6e)."""
    batch_pad = _round_up(batch, _LANE)
    tb = min(_round_up(block_batch, _LANE), batch_pad)
    batch_pad = _round_up(batch_pad, tb)
    if batch_pad // tb == 1 and batch_pad >= 2 * _LANE:
        tb = _round_up(batch_pad // 2, _LANE)
        batch_pad = 2 * tb
    return batch_pad, tb


def dnn_forward(x, prepared, *, block_batch=2048):
    """x: (batch, input_shape) f32. prepared: output of prepare_params()."""
    batch, in_dim = x.shape
    assert in_dim == prepared["in_dim"]
    out_dim = prepared["out_dim"]
    in_pad = prepared["w1"].shape[1]
    out_sub = prepared["w3"].shape[0]

    batch_pad, tb = _choose_tiling(batch, block_batch)
    grid = (batch_pad // tb,)

    # x^T in bf16, zero-padded: cast + transpose + pad fuse into one pass under jit.
    xT = jnp.pad(x.astype(jnp.bfloat16).T,
                 ((0, in_pad - in_dim), (0, batch_pad - batch)))

    def resident(arr):  # full-array VMEM resident, same block every grid step
        return pl.BlockSpec(arr.shape, lambda i: (0, 0))

    weight_keys = ("w1", "b1", "w2", "b2", "w3", "b3")
    in_specs = [pl.BlockSpec((in_pad, tb), lambda i: (0, i))] + [
        resident(prepared[k]) for k in weight_keys
    ]
    out_specs = pl.BlockSpec((out_sub, tb), lambda i: (0, i))

    flops = 2 * batch_pad * (in_pad * HIDDEN + HIDDEN * HIDDEN + HIDDEN * out_sub)
    bytes_accessed = (
        xT.size * xT.dtype.itemsize
        + batch_pad * out_sub * 4
        + sum(int(prepared[k].size) * prepared[k].dtype.itemsize for k in weight_keys)
    )

    outT = pl.pallas_call(
        _dnn_kernel,
        out_shape=jax.ShapeDtypeStruct((out_sub, batch_pad), jnp.float32),
        grid=grid,
        in_specs=in_specs,
        out_specs=out_specs,
        compiler_params=pltpu.CompilerParams(
            dimension_semantics=("parallel",),
        ),
        cost_estimate=pl.CostEstimate(
            flops=flops, transcendentals=0, bytes_accessed=bytes_accessed
        ),
    )(xT, *(prepared[k] for k in weight_keys))

    # Narrow (out_sub, batch_pad) slab -> (batch, out_dim); cheap slice + transpose.
    return outT[:out_dim, :batch].T


def dnn_reference(x, params):
    """Plain-JAX reference mirroring the kernel's bf16-operand / f32-accumulate math."""
    def mm(a, w):
        return jnp.dot(a.astype(jnp.bfloat16), w.astype(jnp.bfloat16),
                       preferred_element_type=jnp.float32)

    h1 = jnp.maximum(mm(x, params["w1"]) + params["b1"], 0.0)
    h2 = jnp.maximum(mm(h1, params["w2"]) + params["b2"], 0.0)
    return mm(h2, params["w3"]) + params["b3"]


if __name__ == "__main__":
    # Boston housing regression: 13 input features, 1 output.
    batch, input_shape, output_shape = 8, 13, 1

    key = jax.random.PRNGKey(0)
    kx, kp = jax.random.split(key)
    x = jax.random.normal(kx, (batch, input_shape), jnp.float32)

    params = init_params(kp, input_shape, output_shape)
    prepared = prepare_params(params)

    fwd = jax.jit(lambda xx: dnn_forward(xx, prepared))
    out = jax.block_until_ready(fwd(x))

    ref = dnn_reference(x, params)
    assert out.shape == (batch, output_shape)
    assert jnp.allclose(out, ref, atol=1e-4, rtol=1e-4)

    print("KERNEL_OK")
</pallas_src>

<mosaic_0001>
module attributes {stable_mosaic.version = 11 : i64} {
  func.func @_dnn_kernel(%arg0: i32, %arg1: memref<16x128xbf16, #tpu.memory_space<vmem>>, %arg2: memref<64x16xbf16, #tpu.memory_space<vmem>>, %arg3: memref<64x1xf32, #tpu.memory_space<vmem>>, %arg4: memref<64x64xbf16, #tpu.memory_space<vmem>>, %arg5: memref<64x1xf32, #tpu.memory_space<vmem>>, %arg6: memref<8x64xbf16, #tpu.memory_space<vmem>>, %arg7: memref<8x1xf32, #tpu.memory_space<vmem>>, %arg8: memref<8x128xf32, #tpu.memory_space<vmem>>) attributes {dimension_semantics = [#tpu.dimension_semantics<parallel>], iteration_bounds = array<i64: 1>, scalar_prefetch = 0 : i64, scratch_operands = 0 : i64, tpu.core_type = #tpu.core_type<tc>, window_params = [{transform_indices = @transform_0, window_bounds = array<i64: 16, 128>}, {pipeline_mode = #tpu.pipeline_mode<synchronous>, transform_indices = @transform_1, window_bounds = array<i64: 64, 16>}, {pipeline_mode = #tpu.pipeline_mode<synchronous>, transform_indices = @transform_2, window_bounds = array<i64: 64, 1>}, {pipeline_mode = #tpu.pipeline_mode<synchronous>, transform_indices = @transform_3, window_bounds = array<i64: 64, 64>}, {pipeline_mode = #tpu.pipeline_mode<synchronous>, transform_indices = @transform_4, window_bounds = array<i64: 64, 1>}, {pipeline_mode = #tpu.pipeline_mode<synchronous>, transform_indices = @transform_5, window_bounds = array<i64: 8, 64>}, {pipeline_mode = #tpu.pipeline_mode<synchronous>, transform_indices = @transform_6, window_bounds = array<i64: 8, 1>}, {transform_indices = @transform_7, window_bounds = array<i64: 8, 128>}]} {
    %c0 = arith.constant 0 : index
    %c0_0 = arith.constant 0 : index
    %0 = vector.load %arg1[%c0, %c0_0] : memref<16x128xbf16, #tpu.memory_space<vmem>>, vector<16x128xbf16>
    %c0_1 = arith.constant 0 : index
    %c0_2 = arith.constant 0 : index
    %1 = vector.load %arg2[%c0_1, %c0_2] : memref<64x16xbf16, #tpu.memory_space<vmem>>, vector<64x16xbf16>
    %cst = arith.constant dense<0.000000e+00> : vector<64x128xf32>
    %2 = tpu.matmul %1, %0, %cst {dimension_numbers = #tpu.dot_dimension_numbers<[1], [0], [0], [1], [0, 0, 1, 1], [], []>} : vector<64x16xbf16>, vector<16x128xbf16>, vector<64x128xf32> -> vector<64x128xf32>
    %c0_3 = arith.constant 0 : index
    %c0_4 = arith.constant 0 : index
    %3 = vector.load %arg3[%c0_3, %c0_4] : memref<64x1xf32, #tpu.memory_space<vmem>>, vector<64x1xf32>
    %4 = vector.broadcast %3 : vector<64x1xf32> to vector<64x128xf32>
    %5 = arith.addf %2, %4 : vector<64x128xf32>
    %cst_5 = arith.constant 0.000000e+00 : f32
    %6 = vector.broadcast %cst_5 : f32 to vector<64x128xf32>
    %7 = arith.maximumf %5, %6 : vector<64x128xf32>
    %c0_6 = arith.constant 0 : index
    %c0_7 = arith.constant 0 : index
    %8 = vector.load %arg4[%c0_6, %c0_7] : memref<64x64xbf16, #tpu.memory_space<vmem>>, vector<64x64xbf16>
    %9 = arith.truncf %7 : vector<64x128xf32> to vector<64x128xbf16>
    %cst_8 = arith.constant dense<0.000000e+00> : vector<64x128xf32>
    %10 = tpu.matmul %8, %9, %cst_8 {dimension_numbers = #tpu.dot_dimension_numbers<[1], [0], [0], [1], [0, 0, 1, 1], [], []>} : vector<64x64xbf16>, vector<64x128xbf16>, vector<64x128xf32> -> vector<64x128xf32>
    %c0_9 = arith.constant 0 : index
    %c0_10 = arith.constant 0 : index
    %11 = vector.load %arg5[%c0_9, %c0_10] : memref<64x1xf32, #tpu.memory_space<vmem>>, vector<64x1xf32>
    %12 = vector.broadcast %11 : vector<64x1xf32> to vector<64x128xf32>
    %13 = arith.addf %10, %12 : vector<64x128xf32>
    %cst_11 = arith.constant 0.000000e+00 : f32
    %14 = vector.broadcast %cst_11 : f32 to vector<64x128xf32>
    %15 = arith.maximumf %13, %14 : vector<64x128xf32>
    %c0_12 = arith.constant 0 : index
    %c0_13 = arith.constant 0 : index
    %16 = vector.load %arg6[%c0_12, %c0_13] : memref<8x64xbf16, #tpu.memory_space<vmem>>, vector<8x64xbf16>
    %17 = arith.truncf %15 : vector<64x128xf32> to vector<64x128xbf16>
    %cst_14 = arith.constant dense<0.000000e+00> : vector<8x128xf32>
    %18 = tpu.matmul %16, %17, %cst_14 {dimension_numbers = #tpu.dot_dimension_numbers<[1], [0], [0], [1], [0, 0, 1, 1], [], []>} : vector<8x64xbf16>, vector<64x128xbf16>, vector<8x128xf32> -> vector<8x128xf32>
    %c0_15 = arith.constant 0 : index
    %c0_16 = arith.constant 0 : index
    %19 = vector.load %arg7[%c0_15, %c0_16] : memref<8x1xf32, #tpu.memory_space<vmem>>, vector<8x1xf32>
    %20 = vector.broadcast %19 : vector<8x1xf32> to vector<8x128xf32>
    %21 = arith.addf %18, %20 : vector<8x128xf32>
    %c0_17 = arith.constant 0 : index
    %c0_18 = arith.constant 0 : index
    %22 = vector.load %arg8[%c0_17, %c0_18] : memref<8x128xf32, #tpu.memory_space<vmem>>, vector<8x128xf32>
    tpu.vector_store %arg8[%c0_17, %c0_18], %21 {strides = array<i32>} : memref<8x128xf32, #tpu.memory_space<vmem>>, vector<8x128xf32>,
    return
  }
  func.func @transform_0(%arg0: i32) -> (i32, i32) {
    %c0_i32 = arith.constant 0 : i32
    %c0_i32_0 = arith.constant 0 : i32
    return %c0_i32, %arg0 : i32, i32
  }
  func.func @transform_1(%arg0: i32) -> (i32, i32) {
    %c0_i32 = arith.constant 0 : i32
    %c0_i32_0 = arith.constant 0 : i32
    %c0_i32_1 = arith.constant 0 : i32
    return %c0_i32, %c0_i32_0 : i32, i32
  }
  func.func @transform_2(%arg0: i32) -> (i32, i32) {
    %c0_i32 = arith.constant 0 : i32
    %c0_i32_0 = arith.constant 0 : i32
    %c0_i32_1 = arith.constant 0 : i32
    return %c0_i32, %c0_i32_0 : i32, i32
  }
  func.func @transform_3(%arg0: i32) -> (i32, i32) {
    %c0_i32 = arith.constant 0 : i32
    %c0_i32_0 = arith.constant 0 : i32
    %c0_i32_1 = arith.constant 0 : i32
    return %c0_i32, %c0_i32_0 : i32, i32
  }
  func.func @transform_4(%arg0: i32) -> (i32, i32) {
    %c0_i32 = arith.constant 0 : i32
    %c0_i32_0 = arith.constant 0 : i32
    %c0_i32_1 = arith.constant 0 : i32
    return %c0_i32, %c0_i32_0 : i32, i32
  }
  func.func @transform_5(%arg0: i32) -> (i32, i32) {
    %c0_i32 = arith.constant 0 : i32
    %c0_i32_0 = arith.constant 0 : i32
    %c0_i32_1 = arith.constant 0 : i32
    return %c0_i32, %c0_i32_0 : i32, i32
  }
  func.func @transform_6(%arg0: i32) -> (i32, i32) {
    %c0_i32 = arith.constant 0 : i32
    %c0_i32_0 = arith.constant 0 : i32
    %c0_i32_1 = arith.constant 0 : i32
    return %c0_i32, %c0_i32_0 : i32, i32
  }
  func.func @transform_7(%arg0: i32) -> (i32, i32) {
    %c0_i32 = arith.constant 0 : i32
    %c0_i32_0 = arith.constant 0 : i32
    return %c0_i32, %arg0 : i32, i32
  }
}

</mosaic_0001>

<llo_original>
// kernel: _lambda_.1
$region0: #{_lambda_.1}
  #allocation0 [shape = 'u32[]', space=smem, size = 0x4, offset = 0x4, fixed_abs, tag = 'smem constant byte address 0x4 - core index']
  #allocation1 [shape = 'u32[144,128]{1,0:T(1,128)}', space=vmem, size = 0x12000, scoped, tag = 'internal scratch']
  %s0 = inlined_call_operand.vmem [shape: bf16[16,128], index: 0, kind: input, shape index: {}]
  %s1 = inlined_call_operand.vmem [shape: bf16[64,16], index: 1, kind: input, shape index: {}]
  %s2 = inlined_call_operand.hbm [shape: f32[64,1], index: 2, kind: input, shape index: {}]
  %s3 = inlined_call_operand.vmem [shape: bf16[64,64], index: 3, kind: input, shape index: {}]
  %s4 = inlined_call_operand.hbm [shape: f32[64,1], index: 4, kind: input, shape index: {}]
  %s5 = inlined_call_operand.hbm [shape: bf16[8,64], index: 5, kind: input, shape index: {}]
  %s6 = inlined_call_operand.hbm [shape: f32[8,1], index: 6, kind: input, shape index: {}]
  %s7 = inlined_call_operand.vmem [shape: f32[8,128], index: 7, kind: output, shape index: {}]
  %s8 = sld [smem:[#allocation0]]
  $region54: #{_lambda_.1} parent=0
    _
  %s10 = ssub.s32 1, %s8
  %s11 = scalar_select 0, %s10, %s8
  $region1: #{_lambda_.1} parent=0
    #allocation2 [shape = 'u8[32768]{0}', space=vmem, size = 0x8000, scoped, tag = 'input window, operand 2, single buffered']
    #allocation3 [shape = 's32[1]{0}', space=sflag, size = 0x4, scoped, tag = 'scoped memory for _lambda_.1']
    #allocation4 [shape = 'u8[32768]{0}', space=vmem, size = 0x8000, scoped, tag = 'input window, operand 4, single buffered']
    #allocation5 [shape = 's32[1]{0}', space=sflag, size = 0x4, scoped, tag = 'scoped memory for _lambda_.1']
    #allocation6 [shape = 'u8[2048]{0}', space=vmem, size = 0x800, scoped, tag = 'input window, operand 5, single buffered']
    #allocation7 [shape = 'u8[4096]{0}', space=vmem, size = 0x1000, scoped, tag = 'input window, operand 6, single buffered']
    #allocation8 [shape = 's32[1]{0}', space=sflag, size = 0x4, scoped, tag = 'scoped memory for _lambda_.1']
    %12 = vsyncpa [#allocation3], 0
    %13 = vsyncpa [#allocation5], 0
    %14 = vsyncpa [#allocation8], 0
    // Predicated region
    $region2: #{_lambda_.1} parent=1 // pred_check
      _
    $region3: #{_lambda_.1} parent=1 // pred_check_branch
      %16 = sbr.rel (0) target = $region5
    $region4: #{_lambda_.1} parent=1 // pred_region
      _
    $region5: #{_lambda_.1} parent=1 // pred_fallthru
      _
    // Predicated region
    $region6: #{_lambda_.1} parent=1 // pred_check
      _
    $region7: #{_lambda_.1} parent=1 // pred_check_branch
      %18 = sbr.rel (0) target = $region9
    $region8: #{_lambda_.1} parent=1 // pred_region
      _
    $region9: #{_lambda_.1} parent=1 // pred_fallthru
      _
    // Predicated region
    $region10: #{_lambda_.1} parent=1 // pred_check
      _
    $region11: #{_lambda_.1} parent=1 // pred_check_branch
      %20 = sbr.rel (0) target = $region13
    $region12: #{_lambda_.1} parent=1 // pred_region
      %s22 = ssub.s32 1024, 1024
      %23 = vsyncadd [#allocation3], %s22
      %s24 = sshll.u32 [#allocation2], 4
      %s25 = int_to_ptr.vmem [resolvable:$true] %s24
      %30 = dma.hbm_to_vmem [thread:$0]  %s2, 1024, %s25, [#allocation3], 128, 128, 8
    $region13: #{_lambda_.1} parent=1 // pred_fallthru
      _
    // Predicated region
    $region14: #{_lambda_.1} parent=1 // pred_check
      _
    $region15: #{_lambda_.1} parent=1 // pred_check_branch
      %32 = sbr.rel (0) target = $region17
    $region16: #{_lambda_.1} parent=1 // pred_region
      _
    $region17: #{_lambda_.1} parent=1 // pred_fallthru
      _
    // Predicated region
    $region18: #{_lambda_.1} parent=1 // pred_check
      _
    $region19: #{_lambda_.1} parent=1 // pred_check_branch
      %34 = sbr.rel (0) target = $region21
    $region20: #{_lambda_.1} parent=1 // pred_region
      %s36 = ssub.s32 1024, 1024
      %37 = vsyncadd [#allocation5], %s36
      %s38 = sshll.u32 [#allocation4], 4
      %s39 = int_to_ptr.vmem [resolvable:$true] %s38
      %44 = dma.hbm_to_vmem [thread:$0]  %s4, 1024, %s39, [#allocation5], 128, 128, 8
    $region21: #{_lambda_.1} parent=1 // pred_fallthru
      _
    // Predicated region
    $region22: #{_lambda_.1} parent=1 // pred_check
      _
    $region23: #{_lambda_.1} parent=1 // pred_check_branch
      %46 = sbr.rel (0) target = $region25
    $region24: #{_lambda_.1} parent=1 // pred_region
      %s48 = ssub.s32 64, 64
      %49 = vsyncadd [#allocation5], %s48
      %s51 = sshll.u32 [#allocation6], 4
      %s52 = int_to_ptr.vmem [resolvable:$true] %s51
      %54 = dma.hbm_to_vmem [thread:$0]  %s5, 64, %s52, [#allocation5]
    $region25: #{_lambda_.1} parent=1 // pred_fallthru
      _
    // Predicated region
    $region26: #{_lambda_.1} parent=1 // pred_check
      _
    $region27: #{_lambda_.1} parent=1 // pred_check_branch
      %56 = sbr.rel (0) target = $region29
    $region28: #{_lambda_.1} parent=1 // pred_region
      %s58 = ssub.s32 128, 128
      %59 = vsyncadd [#allocation8], %s58
      %s61 = sshll.u32 [#allocation7], 4
      %s62 = int_to_ptr.vmem [resolvable:$true] %s61
      %64 = dma.hbm_to_vmem [thread:$0]  %s6, 128, %s62, [#allocation8]
    $region29: #{_lambda_.1} parent=1 // pred_fallthru
      _
    // Predicated region
    $region30: #{_lambda_.1} parent=1 // pred_check
      _
    $region31: #{_lambda_.1} parent=1 // pred_check_branch
      %66 = sbr.rel (0) target = $region33
    $region32: #{_lambda_.1} parent=1 // pred_region
      %67 = dma.done [#allocation3], 1024
    $region33: #{_lambda_.1} parent=1 // pred_fallthru
      _
    // Predicated region
    $region34: #{_lambda_.1} parent=1 // pred_check
      _
    $region35: #{_lambda_.1} parent=1 // pred_check_branch
      %69 = sbr.rel (0) target = $region37
    $region36: #{_lambda_.1} parent=1 // pred_region
      %70 = dma.done [#allocation5], 1024
    $region37: #{_lambda_.1} parent=1 // pred_fallthru
      _
    // Predicated region
    $region38: #{_lambda_.1} parent=1 // pred_check
      _
    $region39: #{_lambda_.1} parent=1 // pred_check_branch
      %72 = sbr.rel (0) target = $region41
    $region40: #{_lambda_.1} parent=1 // pred_region
      %73 = dma.done [#allocation5], 64
    $region41: #{_lambda_.1} parent=1 // pred_fallthru
      _
    // Predicated region
    $region42: #{_lambda_.1} parent=1 // pred_check
      _
    $region43: #{_lambda_.1} parent=1 // pred_check_branch
      %75 = sbr.rel (0) target = $region45
    $region44: #{_lambda_.1} parent=1 // pred_region
      %76 = dma.done [#allocation8], 128
    $region45: #{_lambda_.1} parent=1 // pred_fallthru
      _
    %v78 = vld [vmem:[%s0] sm:$0xf]
    %v79 = vld [vmem:[%s0 + $0x4] sm:$0xf]
    %v80 = vld [vmem:[%s1] sm:$0xf]
    %v81 = vld [vmem:[%s1 + $0x4] sm:$0xf]
    %v82 = vld [vmem:[%s1 + $0x8] sm:$0xf]
    %v83 = vld [vmem:[%s1 + $0xc] sm:$0xf]
    %v84 = vld [vmem:[%s1 + $0x10] sm:$0xf]
    %v85 = vld [vmem:[%s1 + $0x14] sm:$0xf]
    %v86 = vld [vmem:[%s1 + $0x18] sm:$0xf]
    %v87 = vld [vmem:[%s1 + $0x1c] sm:$0xf]
    %v88 = vld [vmem:[#allocation2] sm:$0xff]
    %v89 = vld [vmem:[#allocation2 + $0x8] sm:$0xff]
    %v90 = vld [vmem:[#allocation2 + $0x10] sm:$0xff]
    %v91 = vld [vmem:[#allocation2 + $0x18] sm:$0xff]
    %v92 = vld [vmem:[#allocation2 + $0x20] sm:$0xff]
    %v93 = vld [vmem:[#allocation2 + $0x28] sm:$0xff]
    %v94 = vld [vmem:[#allocation2 + $0x30] sm:$0xff]
    %v95 = vld [vmem:[#allocation2 + $0x38] sm:$0xff]
    %97 = vset.pattern.permute.xlu0 0
    %98 = vperm.xlu0 %97, %v88
    %v99 = vpop.permute.xlu0 %98
    %102 = vset.pattern.permute.xlu0 0
    %103 = vperm.xlu0 %102, %v89
    %v104 = vpop.permute.xlu0 %103
    %107 = vset.pattern.permute.xlu0 0
    %108 = vperm.xlu0 %107, %v90
    %v109 = vpop.permute.xlu0 %108
    %112 = vset.pattern.permute.xlu0 0
    %113 = vperm.xlu0 %112, %v91
    %v114 = vpop.permute.xlu0 %113
    %117 = vset.pattern.permute.xlu0 0
    %118 = vperm.xlu0 %117, %v92
    %v119 = vpop.permute.xlu0 %118
    %122 = vset.pattern.permute.xlu0 0
    %123 = vperm.xlu0 %122, %v93
    %v124 = vpop.permute.xlu0 %123
    %127 = vset.pattern.permute.xlu0 0
    %128 = vperm.xlu0 %127, %v94
    %v129 = vpop.permute.xlu0 %128
    %132 = vset.pattern.permute.xlu0 0
    %133 = vperm.xlu0 %132, %v95
    %v134 = vpop.permute.xlu0 %133
    %v144 = vunpack.c.l.b16 %v80
    %v145 = vunpack.c.l.b16 %v81
    %v146 = vunpack.c.l.b16 %v82
    %v147 = vunpack.c.l.b16 %v83
    %v148 = vunpack.c.l.b16 %v84
    %v149 = vunpack.c.l.b16 %v85
    %v150 = vunpack.c.l.b16 %v86
    %v151 = vunpack.c.l.b16 %v87
    %v152 = vpack.c.b16 %v145, %v144
    %v153 = vpack.c.b16 %v147, %v146
    %v154 = vpack.c.b16 %v149, %v148
    %v155 = vpack.c.b16 %v151, %v150
    %v158 = vunpack.c.l.b16 %v78
    %v159 = vunpack.c.l.b16 %v79
    %v160 = vpack.c.b16 %v159, %v158
    %vm162 = vcmask 130048
    %v164 = vsel %vm162, %v152, 0
    %v167 = vsel %vm162, %v153, 0
    %v170 = vsel %vm162, %v154, 0
    %v173 = vsel %vm162, %v155, 0
    %175 = vmatprep.subr.bf16.mxu0 0
    %176 = vmatpush1.bf16.msra.mxu0 %v160
    %177 = vmatprep.subr.bf16.mxu0 0
    %178 = vmatpush1.bf16.msra.mxu0 0
    %179 = vmatprep.subr.bf16.mxu0 0
    %180 = vmatpush1.bf16.msra.mxu0 0
    %181 = vmatprep.subr.bf16.mxu0 0
    %182 = vmatpush1.bf16.msra.mxu0 0
    %183 = vmatprep.subr.bf16.mxu0 0
    %184 = vmatpush1.bf16.msra.mxu0 0
    %185 = vmatprep.subr.bf16.mxu0 0
    %186 = vmatpush1.bf16.msra.mxu0 0
    %187 = vmatprep.subr.bf16.mxu0 0
    %188 = vmatpush1.bf16.msra.mxu0 0
    %189 = vmatprep.subr.bf16.mxu0 0
    %190 = vmatpush1.bf16.msra.mxu0 0
    %191 = vmatprep.subr.bf16.mxu0 0
    %192 = vmatpush1.bf16.msra.mxu0 0
    %193 = vmatprep.subr.bf16.mxu0 0
    %194 = vmatpush1.bf16.msra.mxu0 0
    %195 = vmatprep.subr.bf16.mxu0 0
    %196 = vmatpush1.bf16.msra.mxu0 0
    %197 = vmatprep.subr.bf16.mxu0 0
    %198 = vmatpush1.bf16.msra.mxu0 0
    %199 = vmatprep.subr.bf16.mxu0 0
    %200 = vmatpush1.bf16.msra.mxu0 0
    %201 = vmatprep.subr.bf16.mxu0 0
    %202 = vmatpush1.bf16.msra.mxu0 0
    %203 = vmatprep.subr.bf16.mxu0 0
    %204 = vmatpush1.bf16.msra.mxu0 0
    %205 = vmatprep.subr.bf16.mxu0 0
    %206 = vmatpush1.bf16.msra.mxu0 0
    %207 = vmatprep.mubr.bf16.mxu0 0
    %208 = vmatmul.mubr.bf16.gmra.mrb[0].mxu0 %v164
    %v209 = vpop.f32.mrb[0].mxu0
    %v210 = vadd.f32 %v99, %v209
    %v211 = vpop.f32.mrb[0].mxu0
    %v212 = vpop.f32.mrb[0].mxu0
    %v213 = vadd.f32 %v104, %v212
    %v214 = vpop.f32.mrb[0].mxu0
    %215 = vmatprep.mubr.bf16.mxu0 0
    %216 = vmatmul.mubr.bf16.gmra.mrb[0].mxu0 %v167
    %v217 = vpop.f32.mrb[0].mxu0
    %v218 = vadd.f32 %v109, %v217
    %v219 = vpop.f32.mrb[0].mxu0
    %v220 = vpop.f32.mrb[0].mxu0
    %v221 = vadd.f32 %v114, %v220
    %v222 = vpop.f32.mrb[0].mxu0
    %223 = vmatprep.mubr.bf16.mxu0 0
    %224 = vmatmul.mubr.bf16.gmra.mrb[0].mxu0 %v170
    %v225 = vpop.f32.mrb[0].mxu0
    %v226 = vadd.f32 %v119, %v225
    %v227 = vpop.f32.mrb[0].mxu0
    %v228 = vpop.f32.mrb[0].mxu0
    %v229 = vadd.f32 %v124, %v228
    %v230 = vpop.f32.mrb[0].mxu0
    %231 = vmatprep.mubr.bf16.mxu0 0
    %232 = vmatmul.mubr.bf16.gmra.mrb[0].mxu0 %v173
    %v233 = vpop.f32.mrb[0].mxu0
    %v234 = vadd.f32 %v129, %v233
    %v235 = vpop.f32.mrb[0].mxu0
    %v236 = vpop.f32.mrb[0].mxu0
    %v237 = vadd.f32 %v134, %v236
    %v238 = vpop.f32.mrb[0].mxu0
    %239 = vdwg.mxu0
    %v240 = vmax.f32 %v210, 0.0
    %v241 = vmax.f32 %v213, 0.0
    %v242 = vmax.f32 %v218, 0.0
    %v243 = vmax.f32 %v221, 0.0
    %v244 = vmax.f32 %v226, 0.0
    %v245 = vmax.f32 %v229, 0.0
    %v246 = vmax.f32 %v234, 0.0
    %v247 = vmax.f32 %v237, 0.0
    %v248 = vld [vmem:[%s3] sm:$0xf]
    %v249 = vld [vmem:[%s3 + $0x4] sm:$0xf]
    %v250 = vld [vmem:[%s3 + $0x8] sm:$0xf]
    %v251 = vld [vmem:[%s3 + $0xc] sm:$0xf]
    %v252 = vld [vmem:[%s3 + $0x10] sm:$0xf]
    %v253 = vld [vmem:[%s3 + $0x14] sm:$0xf]
    %v254 = vld [vmem:[%s3 + $0x18] sm:$0xf]
    %v255 = vld [vmem:[%s3 + $0x1c] sm:$0xf]
    %v256 = vpack.c.bf16 %v241, %v240
    %v257 = vpack.c.bf16 %v243, %v242
    %v258 = vpack.c.bf16 %v245, %v244
    %v259 = vpack.c.bf16 %v247, %v246
    %v260 = vld [vmem:[#allocation4] sm:$0xff]
    %v261 = vld [vmem:[#allocation4 + $0x8] sm:$0xff]
    %v262 = vld [vmem:[#allocation4 + $0x10] sm:$0xff]
    %v263 = vld [vmem:[#allocation4 + $0x18] sm:$0xff]
    %v264 = vld [vmem:[#allocation4 + $0x20] sm:$0xff]
    %v265 = vld [vmem:[#allocation4 + $0x28] sm:$0xff]
    %v266 = vld [vmem:[#allocation4 + $0x30] sm:$0xff]
    %v267 = vld [vmem:[#allocation4 + $0x38] sm:$0xff]
    %269 = vset.pattern.permute.xlu0 0
    %270 = vperm.xlu0 %269, %v260
    %v271 = vpop.permute.xlu0 %270
    %274 = vset.pattern.permute.xlu0 0
    %275 = vperm.xlu0 %274, %v261
    %v276 = vpop.permute.xlu0 %275
    %279 = vset.pattern.permute.xlu0 0
    %280 = vperm.xlu0 %279, %v262
    %v281 = vpop.permute.xlu0 %280
    %284 = vset.pattern.permute.xlu0 0
    %285 = vperm.xlu0 %284, %v263
    %v286 = vpop.permute.xlu0 %285
    %289 = vset.pattern.permute.xlu0 0
    %290 = vperm.xlu0 %289, %v264
    %v291 = vpop.permute.xlu0 %290
    %294 = vset.pattern.permute.xlu0 0
    %295 = vperm.xlu0 %294, %v265
    %v296 = vpop.permute.xlu0 %295
    %299 = vset.pattern.permute.xlu0 0
    %300 = vperm.xlu0 %299, %v266
    %v301 = vpop.permute.xlu0 %300
    %304 = vset.pattern.permute.xlu0 0
    %305 = vperm.xlu0 %304, %v267
    %v306 = vpop.permute.xlu0 %305
    %v316 = vunpack.c.l.b16 %v248
    %v317 = vunpack.c.l.b16 %v249
    %v318 = vunpack.c.l.b16 %v250
    %v319 = vunpack.c.l.b16 %v251
    %v320 = vunpack.c.l.b16 %v252
    %v321 = vunpack.c.l.b16 %v253
    %v322 = vunpack.c.l.b16 %v254
    %v323 = vunpack.c.l.b16 %v255
    %v324 = vpack.c.b16 %v317, %v316
    %v325 = vpack.c.b16 %v319, %v318
    %v326 = vpack.c.b16 %v321, %v320
    %v327 = vpack.c.b16 %v323, %v322
    %vm328 = vcmask 523264
    %v330 = vsel %vm328, %v324, 0
    %v333 = vsel %vm328, %v325, 0
    %v336 = vsel %vm328, %v326, 0
    %v339 = vsel %vm328, %v327, 0
    %341 = vmatprep.subr.bf16.mxu0 0
    %342 = vmatpush1.bf16.msra.mxu0 %v256
    %343 = vmatprep.subr.bf16.mxu0 0
    %344 = vmatpush1.bf16.msra.mxu0 %v257
    %345 = vmatprep.subr.bf16.mxu0 0
    %346 = vmatpush1.bf16.msra.mxu0 %v258
    %347 = vmatprep.subr.bf16.mxu0 0
    %348 = vmatpush1.bf16.msra.mxu0 %v259
    %349 = vmatprep.subr.bf16.mxu0 0
    %350 = vmatpush1.bf16.msra.mxu0 0
    %351 = vmatprep.subr.bf16.mxu0 0
    %352 = vmatpush1.bf16.msra.mxu0 0
    %353 = vmatprep.subr.bf16.mxu0 0
    %354 = vmatpush1.bf16.msra.mxu0 0
    %355 = vmatprep.subr.bf16.mxu0 0
    %356 = vmatpush1.bf16.msra.mxu0 0
    %357 = vmatprep.subr.bf16.mxu0 0
    %358 = vmatpush1.bf16.msra.mxu0 0
    %359 = vmatprep.subr.bf16.mxu0 0
    %360 = vmatpush1.bf16.msra.mxu0 0
    %361 = vmatprep.subr.bf16.mxu0 0
    %362 = vmatpush1.bf16.msra.mxu0 0
    %363 = vmatprep.subr.bf16.mxu0 0
    %364 = vmatpush1.bf16.msra.mxu0 0
    %365 = vmatprep.subr.bf16.mxu0 0
    %366 = vmatpush1.bf16.msra.mxu0 0
    %367 = vmatprep.subr.bf16.mxu0 0
    %368 = vmatpush1.bf16.msra.mxu0 0
    %369 = vmatprep.subr.bf16.mxu0 0
    %370 = vmatpush1.bf16.msra.mxu0 0
    %371 = vmatprep.subr.bf16.mxu0 0
    %372 = vmatpush1.bf16.msra.mxu0 0
    %373 = vmatprep.mubr.bf16.mxu0 0
    %374 = vmatmul.mubr.bf16.gmra.mrb[0].mxu0 %v330
    %v375 = vpop.f32.mrb[0].mxu0
    %v376 = vadd.f32 %v271, %v375
    %v377 = vpop.f32.mrb[0].mxu0
    %v378 = vpop.f32.mrb[0].mxu0
    %v379 = vadd.f32 %v276, %v378
    %v380 = vpop.f32.mrb[0].mxu0
    %381 = vmatprep.mubr.bf16.mxu0 0
    %382 = vmatmul.mubr.bf16.gmra.mrb[0].mxu0 %v333
    %v383 = vpop.f32.mrb[0].mxu0
    %v384 = vadd.f32 %v281, %v383
    %v385 = vpop.f32.mrb[0].mxu0
    %v386 = vpop.f32.mrb[0].mxu0
    %v387 = vadd.f32 %v286, %v386
    %v388 = vpop.f32.mrb[0].mxu0
    %389 = vmatprep.mubr.bf16.mxu0 0
    %390 = vmatmul.mubr.bf16.gmra.mrb[0].mxu0 %v336
    %v391 = vpop.f32.mrb[0].mxu0
    %v392 = vadd.f32 %v291, %v391
    %v393 = vpop.f32.mrb[0].mxu0
    %v394 = vpop.f32.mrb[0].mxu0
    %v395 = vadd.f32 %v296, %v394
    %v396 = vpop.f32.mrb[0].mxu0
    %397 = vmatprep.mubr.bf16.mxu0 0
    %398 = vmatmul.mubr.bf16.gmra.mrb[0].mxu0 %v339
    %v399 = vpop.f32.mrb[0].mxu0
    %v400 = vadd.f32 %v301, %v399
    %v401 = vpop.f32.mrb[0].mxu0
    %v402 = vpop.f32.mrb[0].mxu0
    %v403 = vadd.f32 %v306, %v402
    %v404 = vpop.f32.mrb[0].mxu0
    %405 = vdwg.mxu0
    %v406 = vmax.f32 %v376, 0.0
    %v407 = vmax.f32 %v379, 0.0
    %v408 = vmax.f32 %v384, 0.0
    %v409 = vmax.f32 %v387, 0.0
    %v410 = vmax.f32 %v392, 0.0
    %v411 = vmax.f32 %v395, 0.0
    %v412 = vmax.f32 %v400, 0.0
    %v413 = vmax.f32 %v403, 0.0
    %v414 = vld [vmem:[#allocation6] sm:$0xf]
    %v415 = vpack.c.bf16 %v407, %v406
    %v416 = vpack.c.bf16 %v409, %v408
    %v417 = vpack.c.bf16 %v411, %v410
    %v418 = vpack.c.bf16 %v413, %v412
    %v419 = vld [vmem:[#allocation7] sm:$0xff]
    %421 = vset.pattern.permute.xlu0 0
    %422 = vperm.xlu0 %421, %v419
    %v423 = vpop.permute.xlu0 %422
    %v426 = vsel %vm328, %v414, 0
    %428 = vmatprep.subr.bf16.mxu0 0
    %429 = vmatpush1.bf16.msra.mxu0 %v415
    %430 = vmatprep.subr.bf16.mxu0 0
    %431 = vmatpush1.bf16.msra.mxu0 %v416
    %432 = vmatprep.subr.bf16.mxu0 0
    %433 = vmatpush1.bf16.msra.mxu0 %v417
    %434 = vmatprep.subr.bf16.mxu0 0
    %435 = vmatpush1.bf16.msra.mxu0 %v418
    %436 = vmatprep.subr.bf16.mxu0 0
    %437 = vmatpush1.bf16.msra.mxu0 0
    %438 = vmatprep.subr.bf16.mxu0 0
    %439 = vmatpush1.bf16.msra.mxu0 0
    %440 = vmatprep.subr.bf16.mxu0 0
    %441 = vmatpush1.bf16.msra.mxu0 0
    %442 = vmatprep.subr.bf16.mxu0 0
    %443 = vmatpush1.bf16.msra.mxu0 0
    %444 = vmatprep.subr.bf16.mxu0 0
    %445 = vmatpush1.bf16.msra.mxu0 0
    %446 = vmatprep.subr.bf16.mxu0 0
    %447 = vmatpush1.bf16.msra.mxu0 0
    %448 = vmatprep.subr.bf16.mxu0 0
    %449 = vmatpush1.bf16.msra.mxu0 0
    %450 = vmatprep.subr.bf16.mxu0 0
    %451 = vmatpush1.bf16.msra.mxu0 0
    %452 = vmatprep.subr.bf16.mxu0 0
    %453 = vmatpush1.bf16.msra.mxu0 0
    %454 = vmatprep.subr.bf16.mxu0 0
    %455 = vmatpush1.bf16.msra.mxu0 0
    %456 = vmatprep.subr.bf16.mxu0 0
    %457 = vmatpush1.bf16.msra.mxu0 0
    %458 = vmatprep.subr.bf16.mxu0 0
    %459 = vmatpush1.bf16.msra.mxu0 0
    %460 = vmatprep.mubr.bf16.mxu0 0
    %461 = vmatmul.mubr.bf16.gmra.mrb[0].mxu0 %v426
    %v462 = vpop.f32.mrb[0].mxu0
    %v463 = vadd.f32 %v423, %v462
    %v464 = vpop.f32.mrb[0].mxu0
    %v465 = vpop.f32.mrb[0].mxu0
    %v466 = vpop.f32.mrb[0].mxu0
    %467 = vdwg.mxu0
    %468 = vst [vmem:[%s7] sm:$0xff] %v463
    // Predicated region
    $region46: #{_lambda_.1} parent=1 // pred_check
      _
    $region47: #{_lambda_.1} parent=1 // pred_check_branch
      %470 = sbr.rel (0) target = $region49
    $region48: #{_lambda_.1} parent=1 // pred_region
      _
    $region49: #{_lambda_.1} parent=1 // pred_fallthru
      _
    // Predicated region
    $region50: #{_lambda_.1} parent=1 // pred_check
      _
    $region51: #{_lambda_.1} parent=1 // pred_check_branch
      %472 = sbr.rel (0) target = $region53
    $region52: #{_lambda_.1} parent=1 // pred_region
      _
    $region53: #{_lambda_.1} parent=1 // pred_fallthru
      _
    %473 = vsyncpa [#allocation3], 1
    %474 = vsyncpa [#allocation5], 1
    %475 = vsyncpa [#allocation8], 1

</llo_original>
